<compile_context>
chip_gen: v5e
topology: v5e:2x2
jax: 0.10.0
libtpu: 0.0.40
codegen_flags: <defaults>
</compile_context>

<pallas_src>
import functools

import jax
import jax.numpy as jnp
from jax.experimental import pallas as pl
from jax.experimental.pallas import tpu as pltpu


def _highway_kernel(x_ref, wpg_ref, bpg_ref, wd_ref, bd_ref, out_ref):
    x = x_ref[...]                          # (tm, D), f32 or bf16
    D = x.shape[-1]

    # Fused proj|gate matmul: (tm, D) @ (D, 2D), f32 accumulation on the MXU.
    pg = jnp.dot(x, wpg_ref[...], preferred_element_type=jnp.float32)
    pg = pg + bpg_ref[...]                  # (1, 2D) bias broadcast, f32

    proj = jnp.maximum(pg[:, :D], 0.0)      # relu, f32
    gate = jax.nn.sigmoid(pg[:, D:])        # sigmoid, f32 (EUP)

    # Highway combine: gate*proj + (1-gate)*x == x + gate*(proj - x), in f32.
    x32 = x.astype(jnp.float32)
    h = x32 + gate * (proj - x32)

    # Downsize matmul; output is lane-dense (O padded to a multiple of 128).
    out = jnp.dot(h.astype(wd_ref.dtype), wd_ref[...],
                  preferred_element_type=jnp.float32)
    out_ref[...] = (out + bd_ref[...]).astype(out_ref.dtype)


@functools.partial(jax.jit, static_argnames=("tm", "compute_dtype"))
def lstm_highway_pallas(x, wp_t, bp, wg_t, bg, wd_t, bd, *, tm=256,
                        compute_dtype=jnp.float32):
    """x: (M, D); wp_t/wg_t: (D, D); wd_t: (D, O); biases (1, D)/(1, O).

    Weights are the transposed nn.Linear weights (row-major matmul layout).
    `compute_dtype=jnp.bfloat16` runs the matmuls with bf16 operands and f32
    accumulation (recommended on v6e/v7x); elementwise math stays f32.
    """
    M, D = x.shape
    O = wd_t.shape[1]

    # Fuse proj/gate weights -> a single (D, 2D) matmul per tile.
    wpg = jnp.concatenate([wp_t, wg_t], axis=1).astype(compute_dtype)
    bpg = jnp.concatenate([bp, bg], axis=1).astype(jnp.float32)

    # Lane-dense output: zero-pad O up to a multiple of 128 lanes.
    O_pad = pl.cdiv(O, 128) * 128
    wd_p = jnp.pad(wd_t, ((0, 0), (0, O_pad - O))).astype(compute_dtype)
    bd_p = jnp.pad(bd, ((0, 0), (0, O_pad - O))).astype(jnp.float32)

    # Row tile: as large as requested, clamped to (sublane-rounded) M; pad M
    # with zero rows so tm_eff divides M_pad exactly.
    tm_eff = min(tm, pl.cdiv(M, 8) * 8)
    tm_eff = max(8, (tm_eff // 8) * 8)
    M_pad = pl.cdiv(M, tm_eff) * tm_eff

    x_p = x.astype(compute_dtype)
    if M_pad != M:
        x_p = jnp.pad(x_p, ((0, M_pad - M), (0, 0)))

    full = lambda i: (0, 0)
    out = pl.pallas_call(
        _highway_kernel,
        out_shape=jax.ShapeDtypeStruct((M_pad, O_pad), jnp.float32),
        grid_spec=pltpu.PrefetchScalarGridSpec(
            num_scalar_prefetch=0,
            grid=(M_pad // tm_eff,),
            in_specs=[
                pl.BlockSpec((tm_eff, D), lambda i: (i, 0)),   # x row tile
                pl.BlockSpec((D, 2 * D), full),                # [Wp^T | Wg^T]
                pl.BlockSpec((1, 2 * D), full),                # [bp | bg]
                pl.BlockSpec((D, O_pad), full),                # Wd^T (padded)
                pl.BlockSpec((1, O_pad), full),                # bd   (padded)
            ],
            out_specs=pl.BlockSpec((tm_eff, O_pad), lambda i: (i, 0)),
        ),
        compiler_params=pltpu.CompilerParams(
            dimension_semantics=("parallel",)),   # megacore-shardable on v7x
    )(x_p, wpg, bpg, wd_p, bd_p)

    return out[:M, :O]


def lstm_highway_ref(x, wp_t, bp, wg_t, bg, wd_t, bd):
    proj = jax.nn.relu(x @ wp_t + bp)
    gate = jax.nn.sigmoid(x @ wg_t + bg)
    h = gate * proj + (1.0 - gate) * x
    return h @ wd_t + bd


if __name__ == "__main__":
    # Small shapes consistent with the module: x of shape (batch, seq, D).
    batch, seq = 2, 8
    input_size, output_size = 128, 64

    key = jax.random.PRNGKey(0)
    kx, kwp, kbp, kwg, kbg, kwd, kbd = jax.random.split(key, 7)

    x = jax.random.normal(kx, (batch, seq, input_size), dtype=jnp.float32)

    # nn.Linear-style init (W is (out, in)); we store W^T for row-major matmul.
    scale = 1.0 / jnp.sqrt(input_size)
    wp_t = jax.random.uniform(kwp, (input_size, input_size), jnp.float32,
                              -scale, scale)
    bp = jax.random.uniform(kbp, (1, input_size), jnp.float32, -scale, scale)
    wg_t = jax.random.uniform(kwg, (input_size, input_size), jnp.float32,
                              -scale, scale)
    bg = jax.random.uniform(kbg, (1, input_size), jnp.float32, -scale, scale)
    wd_t = jax.random.uniform(kwd, (input_size, output_size), jnp.float32,
                              -scale, scale)
    bd = jax.random.uniform(kbd, (1, output_size), jnp.float32, -scale, scale)

    # Flatten leading dims -> (M, D); reshape back afterwards.
    x2d = x.reshape(batch * seq, input_size)
    ref2d = lstm_highway_ref(x2d, wp_t, bp, wg_t, bg, wd_t, bd)

    # 1) f32 path (default; tight tolerance).
    out2d = lstm_highway_pallas(x2d, wp_t, bp, wg_t, bg, wd_t, bd, tm=256)
    jax.block_until_ready(out2d)
    assert jnp.allclose(out2d, ref2d, atol=1e-5, rtol=1e-5), "f32 mismatch"

    # 2) bf16-operand path (v6e/v7x MXU peak), f32 accumulation: looser check.
    out2d_bf16 = lstm_highway_pallas(x2d, wp_t, bp, wg_t, bg, wd_t, bd,
                                     tm=256, compute_dtype=jnp.bfloat16)
    jax.block_until_ready(out2d_bf16)
    assert jnp.allclose(out2d_bf16, ref2d, atol=1e-1, rtol=1e-1), "bf16 mismatch"

    # 3) Ragged M (exercises zero-row padding path).
    xr = jax.random.normal(kx, (150, input_size), dtype=jnp.float32)
    outr = lstm_highway_pallas(xr, wp_t, bp, wg_t, bg, wd_t, bd, tm=256)
    jax.block_until_ready(outr)
    refr = lstm_highway_ref(xr, wp_t, bp, wg_t, bg, wd_t, bd)
    assert jnp.allclose(outr, refr, atol=1e-5, rtol=1e-5), "ragged mismatch"

    out = out2d.reshape(batch, seq, output_size)
    jax.block_until_ready(out)
    print("KERNEL_OK")
</pallas_src>

<mosaic_0001>
module attributes {stable_mosaic.version = 11 : i64} {
  func.func @_highway_kernel(%arg0: i32, %arg1: memref<16x128xf32, #tpu.memory_space<vmem>>, %arg2: memref<128x256xf32, #tpu.memory_space<vmem>>, %arg3: memref<1x256xf32, #tpu.memory_space<vmem>>, %arg4: memref<128x128xf32, #tpu.memory_space<vmem>>, %arg5: memref<1x128xf32, #tpu.memory_space<vmem>>, %arg6: memref<16x128xf32, #tpu.memory_space<vmem>>) attributes {dimension_semantics = [#tpu.dimension_semantics<parallel>], iteration_bounds = array<i64: 1>, scalar_prefetch = 0 : i64, scratch_operands = 0 : i64, tpu.core_type = #tpu.core_type<tc>, window_params = [{transform_indices = @transform_0, window_bounds = array<i64: 16, 128>}, {pipeline_mode = #tpu.pipeline_mode<synchronous>, transform_indices = @transform_1, window_bounds = array<i64: 128, 256>}, {pipeline_mode = #tpu.pipeline_mode<synchronous>, transform_indices = @transform_2, window_bounds = array<i64: 1, 256>}, {pipeline_mode = #tpu.pipeline_mode<synchronous>, transform_indices = @transform_3, window_bounds = array<i64: 128, 128>}, {pipeline_mode = #tpu.pipeline_mode<synchronous>, transform_indices = @transform_4, window_bounds = array<i64: 1, 128>}, {transform_indices = @transform_5, window_bounds = array<i64: 16, 128>}]} {
    %c0 = arith.constant 0 : index
    %c0_0 = arith.constant 0 : index
    %0 = vector.load %arg1[%c0, %c0_0] : memref<16x128xf32, #tpu.memory_space<vmem>>, vector<16x128xf32>
    %c0_1 = arith.constant 0 : index
    %c0_2 = arith.constant 0 : index
    %1 = vector.load %arg2[%c0_1, %c0_2] : memref<128x256xf32, #tpu.memory_space<vmem>>, vector<128x256xf32>
    %cst = arith.constant dense<0.000000e+00> : vector<16x256xf32>
    %2 = tpu.matmul %0, %1, %cst {dimension_numbers = #tpu.dot_dimension_numbers<[1], [0], [0], [1], [0, 0, 1, 1], [], []>} : vector<16x128xf32>, vector<128x256xf32>, vector<16x256xf32> -> vector<16x256xf32>
    %c0_3 = arith.constant 0 : index
    %c0_4 = arith.constant 0 : index
    %3 = vector.load %arg3[%c0_3, %c0_4] : memref<1x256xf32, #tpu.memory_space<vmem>>, vector<1x256xf32>
    %4 = vector.broadcast %3 : vector<1x256xf32> to vector<16x256xf32>
    %5 = arith.addf %2, %4 : vector<16x256xf32>
    %6 = vector.extract_strided_slice %5 {offsets = [0, 0], sizes = [16, 128], strides = [1, 1]} : vector<16x256xf32> to vector<16x128xf32>
    %cst_5 = arith.constant 0.000000e+00 : f32
    %7 = vector.broadcast %cst_5 : f32 to vector<16x128xf32>
    %8 = arith.maximumf %6, %7 : vector<16x128xf32>
    %9 = vector.extract_strided_slice %5 {offsets = [0, 128], sizes = [16, 128], strides = [1, 1]} : vector<16x256xf32> to vector<16x128xf32>
    %10 = arith.negf %9 : vector<16x128xf32>
    %11 = math.exp %10 : vector<16x128xf32>
    %cst_6 = arith.constant 1.000000e+00 : f32
    %12 = vector.broadcast %cst_6 : f32 to vector<16x128xf32>
    %13 = arith.addf %12, %11 : vector<16x128xf32>
    %14 = arith.divf %12, %13 : vector<16x128xf32>
    %15 = arith.subf %8, %0 : vector<16x128xf32>
    %16 = arith.mulf %14, %15 : vector<16x128xf32>
    %17 = arith.addf %0, %16 : vector<16x128xf32>
    %c0_7 = arith.constant 0 : index
    %c0_8 = arith.constant 0 : index
    %18 = vector.load %arg4[%c0_7, %c0_8] : memref<128x128xf32, #tpu.memory_space<vmem>>, vector<128x128xf32>
    %cst_9 = arith.constant dense<0.000000e+00> : vector<16x128xf32>
    %19 = tpu.matmul %17, %18, %cst_9 {dimension_numbers = #tpu.dot_dimension_numbers<[1], [0], [0], [1], [0, 0, 1, 1], [], []>} : vector<16x128xf32>, vector<128x128xf32>, vector<16x128xf32> -> vector<16x128xf32>
    %c0_10 = arith.constant 0 : index
    %c0_11 = arith.constant 0 : index
    %20 = vector.load %arg5[%c0_10, %c0_11] : memref<1x128xf32, #tpu.memory_space<vmem>>, vector<1x128xf32>
    %21 = vector.broadcast %20 : vector<1x128xf32> to vector<16x128xf32>
    %22 = arith.addf %19, %21 : vector<16x128xf32>
    %c0_12 = arith.constant 0 : index
    %c0_13 = arith.constant 0 : index
    %23 = vector.load %arg6[%c0_12, %c0_13] : memref<16x128xf32, #tpu.memory_space<vmem>>, vector<16x128xf32>
    tpu.vector_store %arg6[%c0_12, %c0_13], %22 {strides = array<i32>} : memref<16x128xf32, #tpu.memory_space<vmem>>, vector<16x128xf32>,
    return
  }
  func.func @transform_0(%arg0: i32) -> (i32, i32) {
    %c0_i32 = arith.constant 0 : i32
    %c0_i32_0 = arith.constant 0 : i32
    return %arg0, %c0_i32 : i32, i32
  }
  func.func @transform_1(%arg0: i32) -> (i32, i32) {
    %c0_i32 = arith.constant 0 : i32
    %c0_i32_0 = arith.constant 0 : i32
    %c0_i32_1 = arith.constant 0 : i32
    return %c0_i32, %c0_i32_0 : i32, i32
  }
  func.func @transform_2(%arg0: i32) -> (i32, i32) {
    %c0_i32 = arith.constant 0 : i32
    %c0_i32_0 = arith.constant 0 : i32
    %c0_i32_1 = arith.constant 0 : i32
    return %c0_i32, %c0_i32_0 : i32, i32
  }
  func.func @transform_3(%arg0: i32) -> (i32, i32) {
    %c0_i32 = arith.constant 0 : i32
    %c0_i32_0 = arith.constant 0 : i32
    %c0_i32_1 = arith.constant 0 : i32
    return %c0_i32, %c0_i32_0 : i32, i32
  }
  func.func @transform_4(%arg0: i32) -> (i32, i32) {
    %c0_i32 = arith.constant 0 : i32
    %c0_i32_0 = arith.constant 0 : i32
    %c0_i32_1 = arith.constant 0 : i32
    return %c0_i32, %c0_i32_0 : i32, i32
  }
  func.func @transform_5(%arg0: i32) -> (i32, i32) {
    %c0_i32 = arith.constant 0 : i32
    %c0_i32_0 = arith.constant 0 : i32
    return %arg0, %c0_i32 : i32, i32
  }
}

</mosaic_0001>

<llo_original>
// kernel: lstm_highway_pallas.1
$region0: #{lstm_highway_pallas.1}
  #allocation0 [shape = 'u32[]', space=smem, size = 0x4, offset = 0x4, fixed_abs, tag = 'smem constant byte address 0x4 - core index']
  #allocation1 [shape = 'u32[72,128]{1,0:T(1,128)}', space=vmem, size = 0x9000, scoped, tag = 'internal scratch']
  %s0 = inlined_call_operand.vmem [shape: f32[16,128], index: 0, kind: input, shape index: {}]
  %s1 = inlined_call_operand.vmem [shape: f32[128,256], index: 1, kind: input, shape index: {}]
  %s2 = inlined_call_operand.vmem [shape: f32[1,256], index: 2, kind: input, shape index: {}]
  %s3 = inlined_call_operand.vmem [shape: f32[128,128], index: 3, kind: input, shape index: {}]
  %s4 = inlined_call_operand.vmem [shape: f32[1,128], index: 4, kind: input, shape index: {}]
  %s5 = inlined_call_operand.hbm [shape: f32[16,128], index: 5, kind: output, shape index: {}]
  %s6 = sld [smem:[#allocation0]]
  $region30: #{lstm_highway_pallas.1} parent=0
    _
  %s8 = ssub.s32 1, %s6
  %s9 = scalar_select 0, %s8, %s6
  $region1: #{lstm_highway_pallas.1} parent=0
    #allocation2 [shape = 'u8[8192]{0}', space=vmem, size = 0x2000, scoped, tag = 'output window, operand 0, single buffered']
    #allocation3 [shape = 's32[1]{0}', space=sflag, size = 0x4, scoped, tag = 'scoped memory for lstm_highway_pallas.1']
    %10 = vsyncpa [#allocation3], 0
    // Predicated region
    $region2: #{lstm_highway_pallas.1} parent=1 // pred_check
      _
    $region3: #{lstm_highway_pallas.1} parent=1 // pred_check_branch
      %12 = sbr.rel (0) target = $region5
    $region4: #{lstm_highway_pallas.1} parent=1 // pred_region
      _
    $region5: #{lstm_highway_pallas.1} parent=1 // pred_fallthru
      _
    // Predicated region
    $region6: #{lstm_highway_pallas.1} parent=1 // pred_check
      _
    $region7: #{lstm_highway_pallas.1} parent=1 // pred_check_branch
      %14 = sbr.rel (0) target = $region9
    $region8: #{lstm_highway_pallas.1} parent=1 // pred_region
      _
    $region9: #{lstm_highway_pallas.1} parent=1 // pred_fallthru
      _
    // Predicated region
    $region10: #{lstm_highway_pallas.1} parent=1 // pred_check
      _
    $region11: #{lstm_highway_pallas.1} parent=1 // pred_check_branch
      %16 = sbr.rel (0) target = $region13
    $region12: #{lstm_highway_pallas.1} parent=1 // pred_region
      _
    $region13: #{lstm_highway_pallas.1} parent=1 // pred_fallthru
      _
    // Predicated region
    $region14: #{lstm_highway_pallas.1} parent=1 // pred_check
      _
    $region15: #{lstm_highway_pallas.1} parent=1 // pred_check_branch
      %18 = sbr.rel (0) target = $region17
    $region16: #{lstm_highway_pallas.1} parent=1 // pred_region
      _
    $region17: #{lstm_highway_pallas.1} parent=1 // pred_fallthru
      _
    // Predicated region
    $region18: #{lstm_highway_pallas.1} parent=1 // pred_check
      _
    $region19: #{lstm_highway_pallas.1} parent=1 // pred_check_branch
      %20 = sbr.rel (0) target = $region21
    $region20: #{lstm_highway_pallas.1} parent=1 // pred_region
      _
    $region21: #{lstm_highway_pallas.1} parent=1 // pred_fallthru
      _
    %v21 = vld [vmem:[%s0] sm:$0xff]
    %v22 = vld [vmem:[%s0 + $0x8] sm:$0xff]
    %v23 = vld [vmem:[%s1] sm:$0xff]
    %v24 = vld [vmem:[%s1 + $0x8] sm:$0xff]
    %v25 = vld [vmem:[%s1 + $0x10] sm:$0xff]
    %v26 = vld [vmem:[%s1 + $0x18] sm:$0xff]
    %v27 = vld [vmem:[%s1 + $0x20] sm:$0xff]
    %v28 = vld [vmem:[%s1 + $0x28] sm:$0xff]
    %v29 = vld [vmem:[%s1 + $0x30] sm:$0xff]
    %v30 = vld [vmem:[%s1 + $0x38] sm:$0xff]
    %v31 = vld [vmem:[%s1 + $0x40] sm:$0xff]
    %v32 = vld [vmem:[%s1 + $0x48] sm:$0xff]
    %v33 = vld [vmem:[%s1 + $0x50] sm:$0xff]
    %v34 = vld [vmem:[%s1 + $0x58] sm:$0xff]
    %v35 = vld [vmem:[%s1 + $0x60] sm:$0xff]
    %v36 = vld [vmem:[%s1 + $0x68] sm:$0xff]
    %v37 = vld [vmem:[%s1 + $0x70] sm:$0xff]
    %v38 = vld [vmem:[%s1 + $0x78] sm:$0xff]
    %v39 = vld [vmem:[%s1 + $0x80] sm:$0xff]
    %v40 = vld [vmem:[%s1 + $0x88] sm:$0xff]
    %v41 = vld [vmem:[%s1 + $0x90] sm:$0xff]
    %v42 = vld [vmem:[%s1 + $0x98] sm:$0xff]
    %v43 = vld [vmem:[%s1 + $0xa0] sm:$0xff]
    %v44 = vld [vmem:[%s1 + $0xa8] sm:$0xff]
    %v45 = vld [vmem:[%s1 + $0xb0] sm:$0xff]
    %v46 = vld [vmem:[%s1 + $0xb8] sm:$0xff]
    %v47 = vld [vmem:[%s1 + $0xc0] sm:$0xff]
    %v48 = vld [vmem:[%s1 + $0xc8] sm:$0xff]
    %v49 = vld [vmem:[%s1 + $0xd0] sm:$0xff]
    %v50 = vld [vmem:[%s1 + $0xd8] sm:$0xff]
    %v51 = vld [vmem:[%s1 + $0xe0] sm:$0xff]
    %v52 = vld [vmem:[%s1 + $0xe8] sm:$0xff]
    %v53 = vld [vmem:[%s1 + $0xf0] sm:$0xff]
    %v54 = vld [vmem:[%s1 + $0xf8] sm:$0xff]
    %v55 = vld [vmem:[%s2] sm:$0x3]
    %v57 = vperm.slane %v55, 0
    %v58 = vperm.slane %v55, 1
    %61 = vmatpush.msra.mxu0 %v53
    %62 = vmatpush.msra.mxu0 %v51
    %63 = vmatpush.msra.mxu0 %v49
    %64 = vmatpush.msra.mxu0 %v47
    %65 = vmatpush.msra.mxu0 %v45
    %66 = vmatpush.msra.mxu0 %v43
    %67 = vmatpush.msra.mxu0 %v41
    %68 = vmatpush.msra.mxu0 %v39
    %69 = vmatpush.msra.mxu0 %v37
    %70 = vmatpush.msra.mxu0 %v35
    %71 = vmatpush.msra.mxu0 %v33
    %72 = vmatpush.msra.mxu0 %v31
    %73 = vmatpush.msra.mxu0 %v29
    %74 = vmatpush.msra.mxu0 %v27
    %75 = vmatpush.msra.mxu0 %v25
    %76 = vmatpush.msra.mxu0 %v23
    %77 = vmatmul.f32.gmra.mxu0 %v21
    %v78 = vpop.f32.mrf.mxu0
    %v79 = vadd.f32 %v57, %v78
    %80 = vmatmul.f32.gmra.mxu0 %v22
    %v81 = vpop.f32.mrf.mxu0
    %v82 = vadd.f32 %v57, %v81
    %83 = vdwg.mxu0
    %84 = vmatpush.msra.mxu0 %v54
    %85 = vmatpush.msra.mxu0 %v52
    %86 = vmatpush.msra.mxu0 %v50
    %87 = vmatpush.msra.mxu0 %v48
    %88 = vmatpush.msra.mxu0 %v46
    %89 = vmatpush.msra.mxu0 %v44
    %90 = vmatpush.msra.mxu0 %v42
    %91 = vmatpush.msra.mxu0 %v40
    %92 = vmatpush.msra.mxu0 %v38
    %93 = vmatpush.msra.mxu0 %v36
    %94 = vmatpush.msra.mxu0 %v34
    %95 = vmatpush.msra.mxu0 %v32
    %96 = vmatpush.msra.mxu0 %v30
    %97 = vmatpush.msra.mxu0 %v28
    %98 = vmatpush.msra.mxu0 %v26
    %99 = vmatpush.msra.mxu0 %v24
    %100 = vmatmul.f32.gmra.mxu0 %v21
    %v101 = vpop.f32.mrf.mxu0
    %v102 = vadd.f32 %v58, %v101
    %103 = vmatmul.f32.gmra.mxu0 %v22
    %v104 = vpop.f32.mrf.mxu0
    %v105 = vadd.f32 %v58, %v104
    %106 = vdwg.mxu0
    %v107 = vmax.f32 %v79, 0.0
    %v108 = vmax.f32 %v82, 0.0
    %v109 = vxor.u32 %v102, 2147483648
    %v110 = vxor.u32 %v105, 2147483648
    %v111 = vmul.f32 %v109, 1.442695
    %v112 = vpow.pop %v111
    %v113 = vmul.f32 %v110, 1.442695
    %v114 = vpow.pop %v113
    %v115 = vadd.f32 %v112, 1.0
    %v116 = vadd.f32 %v114, 1.0
    %v117 = vrcp.pop %v115
    %v118 = vmul.f32 %v115, %v117
    %v119 = vsub.f32 1.0, %v118
    %v120 = vmul.f32 %v117, %v119
    %v121 = vadd.f32 %v117, %v120
    %vm122 = vweird.f32 %v115
    %vm123 = vweird.f32 %v117
    %vm124 = vmor %vm122, %vm123
    %v125 = vsel %vm124, %v117, %v121
    %v126 = vand.u32 2147483647, %v115
    %vm127 = vcmp.eq.f32.partialorder %v126, 8.507059e+37
    %v128 = vand.u32 %v115, 2147483648
    %v129 = vor.u32 1.1754944e-38, %v128
    %v130 = vsel %vm127, %v129, %v125
    %v131 = vmul.f32 1.0, %v130
    %v132 = vrcp.pop %v116
    %v133 = vmul.f32 %v116, %v132
    %v134 = vsub.f32 1.0, %v133
    %v135 = vmul.f32 %v132, %v134
    %v136 = vadd.f32 %v132, %v135
    %vm137 = vweird.f32 %v116
    %vm138 = vweird.f32 %v132
    %vm139 = vmor %vm137, %vm138
    %v140 = vsel %vm139, %v132, %v136
    %v141 = vand.u32 2147483647, %v116
    %vm142 = vcmp.eq.f32.partialorder %v141, 8.507059e+37
    %v143 = vand.u32 %v116, 2147483648
    %v144 = vor.u32 1.1754944e-38, %v143
    %v145 = vsel %vm142, %v144, %v140
    %v146 = vmul.f32 1.0, %v145
    %v147 = vsub.f32 %v107, %v21
    %v148 = vsub.f32 %v108, %v22
    %v149 = vmul.f32 %v131, %v147
    %v150 = vmul.f32 %v146, %v148
    %v151 = vadd.f32 %v21, %v149
    %v152 = vadd.f32 %v22, %v150
    %v153 = vld [vmem:[%s3] sm:$0xff]
    %v154 = vld [vmem:[%s3 + $0x8] sm:$0xff]
    %v155 = vld [vmem:[%s3 + $0x10] sm:$0xff]
    %v156 = vld [vmem:[%s3 + $0x18] sm:$0xff]
    %v157 = vld [vmem:[%s3 + $0x20] sm:$0xff]
    %v158 = vld [vmem:[%s3 + $0x28] sm:$0xff]
    %v159 = vld [vmem:[%s3 + $0x30] sm:$0xff]
    %v160 = vld [vmem:[%s3 + $0x38] sm:$0xff]
    %v161 = vld [vmem:[%s3 + $0x40] sm:$0xff]
    %v162 = vld [vmem:[%s3 + $0x48] sm:$0xff]
    %v163 = vld [vmem:[%s3 + $0x50] sm:$0xff]
    %v164 = vld [vmem:[%s3 + $0x58] sm:$0xff]
    %v165 = vld [vmem:[%s3 + $0x60] sm:$0xff]
    %v166 = vld [vmem:[%s3 + $0x68] sm:$0xff]
    %v167 = vld [vmem:[%s3 + $0x70] sm:$0xff]
    %v168 = vld [vmem:[%s3 + $0x78] sm:$0xff]
    %v169 = vld [vmem:[%s4] sm:$0x1]
    %v171 = vperm.slane %v169, 0
    %173 = vmatpush.msra.mxu0 %v168
    %174 = vmatpush.msra.mxu0 %v167
    %175 = vmatpush.msra.mxu0 %v166
    %176 = vmatpush.msra.mxu0 %v165
    %177 = vmatpush.msra.mxu0 %v164
    %178 = vmatpush.msra.mxu0 %v163
    %179 = vmatpush.msra.mxu0 %v162
    %180 = vmatpush.msra.mxu0 %v161
    %181 = vmatpush.msra.mxu0 %v160
    %182 = vmatpush.msra.mxu0 %v159
    %183 = vmatpush.msra.mxu0 %v158
    %184 = vmatpush.msra.mxu0 %v157
    %185 = vmatpush.msra.mxu0 %v156
    %186 = vmatpush.msra.mxu0 %v155
    %187 = vmatpush.msra.mxu0 %v154
    %188 = vmatpush.msra.mxu0 %v153
    %189 = vmatmul.f32.gmra.mxu0 %v151
    %v190 = vpop.f32.mrf.mxu0
    %v191 = vadd.f32 %v171, %v190
    %192 = vmatmul.f32.gmra.mxu0 %v152
    %v193 = vpop.f32.mrf.mxu0
    %v194 = vadd.f32 %v171, %v193
    %195 = vdwg.mxu0
    %196 = vst [vmem:[#allocation2] sm:$0xff] %v191
    %197 = vst [vmem:[#allocation2 + $0x8] sm:$0xff] %v194
    // Predicated region
    $region22: #{lstm_highway_pallas.1} parent=1 // pred_check
      _
    $region23: #{lstm_highway_pallas.1} parent=1 // pred_check_branch
      %199 = sbr.rel (0) target = $region25
    $region24: #{lstm_highway_pallas.1} parent=1 // pred_region
      %201 = vsyncadd [#allocation3], 0
      %s202 = sshll.u32 [#allocation2], 4
      %s203 = int_to_ptr.vmem [resolvable:$true] %s202
      %s204 = sshll.u32 %s5, 4
      %s205 = int_to_ptr.hbm [resolvable:$true] %s204
      %210 = dma.vmem_to_hbm [thread:$0]  %s203, 256, %s205, [#allocation3], 128, 128, 8
    $region25: #{lstm_highway_pallas.1} parent=1 // pred_fallthru
      _
    // Predicated region
    $region26: #{lstm_highway_pallas.1} parent=1 // pred_check
      _
    $region27: #{lstm_highway_pallas.1} parent=1 // pred_check_branch
      %212 = sbr.rel (0) target = $region29
    $region28: #{lstm_highway_pallas.1} parent=1 // pred_region
      %214 = dma.done [#allocation3], 256
    $region29: #{lstm_highway_pallas.1} parent=1 // pred_fallthru
      _
    %215 = vsyncpa [#allocation3], 1

</llo_original>
